<compile_context>
chip_gen: v5e
topology: v5e:2x2
jax: 0.10.0
libtpu: 0.0.40
codegen_flags: <defaults>
</compile_context>

<pallas_src>
import jax
import jax.numpy as jnp
from jax import lax
from jax.experimental import pallas as pl
from jax.experimental.pallas import tpu as pltpu


_SUB_ROWS = 128  # rows per in-kernel sub-block; keeps the f32 aggr accumulator
                 # (+ dot result) well under the 64-vreg register file.


def sage_gcn_kernel(src_ref, nbr_ref, w_self_ref, w_aggr_ref, out_ref):
    """One node-tile of the SageGCN forward.

    src_ref   : (TILE_N, D_in)      storage dtype
    nbr_ref   : (TILE_N, K*D_in)    storage dtype; neighbor k in lanes [k*D_in, (k+1)*D_in)
    w_self_ref: (D_in, D_hid)       compute dtype (matches src), resident
    w_aggr_ref: (D_in, D_hid)       f32, resident, pre-scaled by 1/K ('mean' folded in)
    out_ref   : (TILE_N, D_hid)
    """
    tile_n, d_in = src_ref.shape
    kd = nbr_ref.shape[1]
    k = kd // d_in

    if tile_n > _SUB_ROWS and tile_n % _SUB_ROWS == 0:
        sub = _SUB_ROWS
    else:
        sub = tile_n
    n_sub = tile_n // sub

    def _sub_block(rows):
        # Streaming neighbor reduction: K dense lane-band vlds -> VPU adds,
        # accumulated in f32 (1/K of the 'mean' is folded into w_aggr).
        aggr = nbr_ref[rows, pl.ds(0, d_in)].astype(jnp.float32)
        for j in range(1, k):   # TODO(synk): chunked unroll / fori for very large K
            aggr = aggr + nbr_ref[rows, pl.ds(j * d_in, d_in)].astype(jnp.float32)

        # Two accumulating MXU dots (no VMEM concat round-trip): the src
        # projection can start on the MXU while the neighbor sum finishes.
        h = jnp.dot(src_ref[rows, :], w_self_ref[...],
                    preferred_element_type=jnp.float32)
        h = h + jnp.dot(aggr, w_aggr_ref[...],
                        preferred_element_type=jnp.float32)

        # 'sum' hidden aggregation is the add above; ReLU in f32, cast on store.
        out_ref[rows, :] = jnp.maximum(h, 0.0).astype(out_ref.dtype)

    if n_sub == 1:
        _sub_block(pl.ds(0, tile_n))
    else:
        # fori_loop (not a static Python for) bounds the accumulator live range.
        def body(c, carry):
            r = pl.multiple_of(c * sub, sub)
            _sub_block(pl.ds(r, sub))
            return carry
        lax.fori_loop(0, n_sub, body, 0)


def _round_down(x, m):
    return (x // m) * m


def _round_up(x, m):
    return ((x + m - 1) // m) * m


def _vmem_target_bytes():
    """Generation-aware per-step VMEM budget (returns (target, capacity))."""
    cap = None
    try:
        cap = getattr(pltpu.get_tpu_info(), "vmem_capacity_bytes", None)
    except Exception:
        cap = None
    if cap is None:
        cap = 64 * 1024 * 1024          # conservative (v7x-sized) fallback
    if cap >= 100 * 1024 * 1024:        # v5e / v6e: 128 MiB physical VMEM
        return 56 * 1024 * 1024, cap    # -> 512-1024 row node tiles (~85% roofline)
    return 26 * 1024 * 1024, cap        # v7x: 64 MiB/TC, respect 32 MiB scoped default


def _auto_tile_n(n, kd, d_in, d_hid, nbr_b, src_b, out_b, w_bytes, target):
    # Double-buffered node-sliced streams + resident (double-buffered) weights.
    per_node = 2 * (kd * nbr_b + d_in * src_b + d_hid * out_b)
    t = (target - w_bytes) // max(per_node, 1)
    t = int(max(16, min(t, 1024, n)))
    if n > 128:
        # Guarantee >= 2 grid steps so the 'parallel' node axis actually lands
        # on both of v7x's TensorCores (one grid step = one idle TC).
        t = min(t, max(128, _round_up(pl.cdiv(n, 2), 128)))
    if t >= 128:
        t = _round_down(t, 128)              # full MXU M-dim / clean sub-blocks
    else:
        t = max(16, _round_down(t, 16))      # bf16-safe sublane rounding
    return min(t, n)


def sage_gcn_forward(src, nbr, w_self, w_aggr, *, tile_n=None,
                     cast_neighbors_to_bf16=False):
    """relu(src @ W_self + mean(nbr, axis=1) @ W_aggr) via a Pallas TPU kernel."""
    n, d_in = src.shape
    _, k, d_in2 = nbr.shape
    assert d_in2 == d_in
    d_hid = w_self.shape[1]
    out_dtype = src.dtype

    # Lane-band neighbor layout: (N, K, D_in) -> (N, K*D_in) is a free
    # row-major-contiguous reshape (no HBM copy).
    nbr2 = nbr.reshape(n, k * d_in)
    if cast_neighbors_to_bf16 and nbr2.dtype == jnp.float32:
        # nbr is K/(K+1) of the input HBM traffic and the kernel is HBM-bound;
        # storing it bf16 (still summed in f32 in-kernel) ~halves that stream.
        nbr2 = nbr2.astype(jnp.bfloat16)

    # Self-projection weight rides the MXU in the input's storage dtype; the
    # aggregator weight stays f32 (its LHS is the f32 neighbor sum) and absorbs
    # the 1/K of the 'mean' aggregator.
    cdtype = jnp.bfloat16 if src.dtype == jnp.bfloat16 else jnp.float32
    w_self_c = w_self.astype(cdtype)
    w_aggr_c = w_aggr.astype(jnp.float32) * (1.0 / k)

    nbr_b = jnp.dtype(nbr2.dtype).itemsize
    src_b = jnp.dtype(src.dtype).itemsize
    out_b = jnp.dtype(out_dtype).itemsize
    # Weights are tiny here; leave them default-double-buffered (accounted x2)
    # rather than risking pipeline_mode tweaks for a ~100 KiB saving.
    w_bytes = 2 * d_in * d_hid * (jnp.dtype(cdtype).itemsize + 4)

    target, vmem_cap = _vmem_target_bytes()
    if tile_n is None:
        tile_n = _auto_tile_n(n, k * d_in, d_in, d_hid,
                              nbr_b, src_b, out_b, w_bytes, target)
    else:
        tile_n = int(min(tile_n, n))
        if tile_n < n:
            tile_n = max(16, _round_down(tile_n, 16))

    # No padding of the node axis: the grid over-covers N and the last partial
    # block is clipped by the pipeline (all in-kernel ops are row-local).
    grid_n = pl.cdiv(n, tile_n)

    per_step = (2 * tile_n * (k * d_in * nbr_b + d_in * src_b + d_hid * out_b)
                + w_bytes)
    vmem_limit = int(max(per_step + per_step // 2, 8 * 1024 * 1024))
    vmem_limit = int(min(vmem_limit, vmem_cap - 16 * 1024 * 1024))

    cost = pl.CostEstimate(
        flops=int(4 * n * d_in * d_hid + n * k * d_in),
        transcendentals=0,
        bytes_accessed=int(n * (k * d_in * nbr_b + d_in * src_b + d_hid * out_b)
                           + d_in * d_hid * (jnp.dtype(cdtype).itemsize + 4)),
    )

    # TODO(synk): for D_hid not a multiple of 128, present a lane-dense output
    # slab from the wrapper to avoid masked vst on writeback.
    out = pl.pallas_call(
        sage_gcn_kernel,
        out_shape=jax.ShapeDtypeStruct((n, d_hid), out_dtype),
        grid_spec=pltpu.PrefetchScalarGridSpec(
            num_scalar_prefetch=0,
            grid=(grid_n,),
            in_specs=[
                pl.BlockSpec((tile_n, d_in), lambda i: (i, 0)),
                pl.BlockSpec((tile_n, k * d_in), lambda i: (i, 0)),
                # Resident weights (constant index_map -> fetched once).
                pl.BlockSpec((d_in, d_hid), lambda i: (0, 0)),
                pl.BlockSpec((d_in, d_hid), lambda i: (0, 0)),
            ],
            out_specs=pl.BlockSpec((tile_n, d_hid), lambda i: (i, 0)),
        ),
        compiler_params=pltpu.CompilerParams(
            dimension_semantics=("parallel",),   # shard node tiles across TCs
            vmem_limit_bytes=vmem_limit,
        ),
        cost_estimate=cost,
    )(src, nbr2, w_self_c, w_aggr_c)
    return out


def kaiming_uniform(key, shape):
    # PyTorch nn.init.kaiming_uniform_ (a=0): bound = sqrt(6 / fan_in),
    # fan_in = dim 1 of the (input_dim, output_dim) tensor.
    fan_in = shape[1]
    bound = (6.0 / fan_in) ** 0.5
    return jax.random.uniform(key, shape, jnp.float32, -bound, bound)


if __name__ == "__main__":
    N, K, D_IN, D_HID = 256, 8, 128, 128

    key = jax.random.PRNGKey(0)
    k_src, k_nbr, k_ws, k_wa = jax.random.split(key, 4)

    src = jax.random.normal(k_src, (N, D_IN), jnp.float32)
    nbr = jax.random.normal(k_nbr, (N, K, D_IN), jnp.float32)
    w_self = kaiming_uniform(k_ws, (D_IN, D_HID))   # SageGCN.weight
    w_aggr = kaiming_uniform(k_wa, (D_IN, D_HID))   # NeighborAggregator.weight

    with jax.default_matmul_precision("highest"):
        ref = jnp.maximum(src @ w_self + jnp.mean(nbr, axis=1) @ w_aggr, 0.0)

    # f32 path, explicit 128-row node tiles (grid of 2).
    out = sage_gcn_forward(src, nbr, w_self, w_aggr, tile_n=128)
    jax.block_until_ready(out)
    assert out.shape == (N, D_HID)
    assert jnp.allclose(out, ref, atol=2e-3, rtol=2e-3), \
        float(jnp.max(jnp.abs(out - ref)))

    # f32 path, auto tiling with N not a tile multiple (exercises the un-padded
    # partial last block; no jnp.pad copy of the neighbor tensor).
    n_odd = N - 37
    out_odd = sage_gcn_forward(src[:n_odd], nbr[:n_odd], w_self, w_aggr)
    jax.block_until_ready(out_odd)
    assert jnp.allclose(out_odd, ref[:n_odd], atol=2e-3, rtol=2e-3)

    # bf16 storage path (auto tiling): bf16 MXU for the src projection, f32
    # neighbor sum kept f32 through its dot.
    src16, nbr16 = src.astype(jnp.bfloat16), nbr.astype(jnp.bfloat16)
    w_self16, w_aggr16 = w_self.astype(jnp.bfloat16), w_aggr.astype(jnp.bfloat16)
    out16 = sage_gcn_forward(src16, nbr16, w_self16, w_aggr16)
    jax.block_until_ready(out16)
    with jax.default_matmul_precision("highest"):
        ref16 = jnp.maximum(
            src16.astype(jnp.float32) @ w_self16.astype(jnp.float32)
            + jnp.mean(nbr16.astype(jnp.float32), axis=1)
            @ w_aggr16.astype(jnp.float32), 0.0)
    assert jnp.allclose(out16.astype(jnp.float32), ref16, atol=5e-2, rtol=5e-2)

    # f32 everywhere except the dominant neighbor stream stored in bf16.
    out_nb = sage_gcn_forward(src, nbr, w_self, w_aggr,
                              cast_neighbors_to_bf16=True)
    jax.block_until_ready(out_nb)
    with jax.default_matmul_precision("highest"):
        ref_nb = jnp.maximum(
            src @ w_self
            + jnp.mean(nbr.astype(jnp.bfloat16).astype(jnp.float32), axis=1)
            @ w_aggr, 0.0)
    assert jnp.allclose(out_nb, ref_nb, atol=1e-2, rtol=1e-2)

    print("KERNEL_OK")
</pallas_src>

<mosaic_0001>
module attributes {stable_mosaic.version = 11 : i64} {
  func.func @sage_gcn_kernel(%arg0: i32, %arg1: memref<128x128xf32, #tpu.memory_space<vmem>>, %arg2: memref<128x1024xf32, #tpu.memory_space<vmem>>, %arg3: memref<128x128xf32, #tpu.memory_space<vmem>>, %arg4: memref<128x128xf32, #tpu.memory_space<vmem>>, %arg5: memref<128x128xf32, #tpu.memory_space<vmem>>) attributes {dimension_semantics = [#tpu.dimension_semantics<parallel>], iteration_bounds = array<i64: 2>, scalar_prefetch = 0 : i64, scratch_operands = 0 : i64, tpu.core_type = #tpu.core_type<tc>, window_params = [{transform_indices = @transform_0, window_bounds = array<i64: 128, 128>}, {transform_indices = @transform_1, window_bounds = array<i64: 128, 1024>}, {pipeline_mode = #tpu.pipeline_mode<synchronous>, transform_indices = @transform_2, window_bounds = array<i64: 128, 128>}, {pipeline_mode = #tpu.pipeline_mode<synchronous>, transform_indices = @transform_3, window_bounds = array<i64: 128, 128>}, {transform_indices = @transform_4, window_bounds = array<i64: 128, 128>}]} {
    %c0 = arith.constant 0 : index
    %c0_0 = arith.constant 0 : index
    %0 = vector.load %arg2[%c0, %c0_0] : memref<128x1024xf32, #tpu.memory_space<vmem>>, vector<128x128xf32>
    %c0_1 = arith.constant 0 : index
    %c128 = arith.constant 128 : index
    %1 = vector.load %arg2[%c0_1, %c128] : memref<128x1024xf32, #tpu.memory_space<vmem>>, vector<128x128xf32>
    %2 = arith.addf %0, %1 : vector<128x128xf32>
    %c0_2 = arith.constant 0 : index
    %c256 = arith.constant 256 : index
    %3 = vector.load %arg2[%c0_2, %c256] : memref<128x1024xf32, #tpu.memory_space<vmem>>, vector<128x128xf32>
    %4 = arith.addf %2, %3 : vector<128x128xf32>
    %c0_3 = arith.constant 0 : index
    %c384 = arith.constant 384 : index
    %5 = vector.load %arg2[%c0_3, %c384] : memref<128x1024xf32, #tpu.memory_space<vmem>>, vector<128x128xf32>
    %6 = arith.addf %4, %5 : vector<128x128xf32>
    %c0_4 = arith.constant 0 : index
    %c512 = arith.constant 512 : index
    %7 = vector.load %arg2[%c0_4, %c512] : memref<128x1024xf32, #tpu.memory_space<vmem>>, vector<128x128xf32>
    %8 = arith.addf %6, %7 : vector<128x128xf32>
    %c0_5 = arith.constant 0 : index
    %c640 = arith.constant 640 : index
    %9 = vector.load %arg2[%c0_5, %c640] : memref<128x1024xf32, #tpu.memory_space<vmem>>, vector<128x128xf32>
    %10 = arith.addf %8, %9 : vector<128x128xf32>
    %c0_6 = arith.constant 0 : index
    %c768 = arith.constant 768 : index
    %11 = vector.load %arg2[%c0_6, %c768] : memref<128x1024xf32, #tpu.memory_space<vmem>>, vector<128x128xf32>
    %12 = arith.addf %10, %11 : vector<128x128xf32>
    %c0_7 = arith.constant 0 : index
    %c896 = arith.constant 896 : index
    %13 = vector.load %arg2[%c0_7, %c896] : memref<128x1024xf32, #tpu.memory_space<vmem>>, vector<128x128xf32>
    %14 = arith.addf %12, %13 : vector<128x128xf32>
    %c0_8 = arith.constant 0 : index
    %c0_9 = arith.constant 0 : index
    %15 = vector.load %arg1[%c0_8, %c0_9] : memref<128x128xf32, #tpu.memory_space<vmem>>, vector<128x128xf32>
    %c0_10 = arith.constant 0 : index
    %c0_11 = arith.constant 0 : index
    %16 = vector.load %arg3[%c0_10, %c0_11] : memref<128x128xf32, #tpu.memory_space<vmem>>, vector<128x128xf32>
    %cst = arith.constant dense<0.000000e+00> : vector<128x128xf32>
    %17 = tpu.matmul %15, %16, %cst {dimension_numbers = #tpu.dot_dimension_numbers<[1], [0], [0], [1], [0, 0, 1, 1], [], []>} : vector<128x128xf32>, vector<128x128xf32>, vector<128x128xf32> -> vector<128x128xf32>
    %c0_12 = arith.constant 0 : index
    %c0_13 = arith.constant 0 : index
    %18 = vector.load %arg4[%c0_12, %c0_13] : memref<128x128xf32, #tpu.memory_space<vmem>>, vector<128x128xf32>
    %cst_14 = arith.constant dense<0.000000e+00> : vector<128x128xf32>
    %19 = tpu.matmul %14, %18, %cst_14 {dimension_numbers = #tpu.dot_dimension_numbers<[1], [0], [0], [1], [0, 0, 1, 1], [], []>} : vector<128x128xf32>, vector<128x128xf32>, vector<128x128xf32> -> vector<128x128xf32>
    %20 = arith.addf %17, %19 : vector<128x128xf32>
    %cst_15 = arith.constant 0.000000e+00 : f32
    %21 = vector.broadcast %cst_15 : f32 to vector<128x128xf32>
    %22 = arith.maximumf %20, %21 : vector<128x128xf32>
    %c0_16 = arith.constant 0 : index
    %c0_17 = arith.constant 0 : index
    %23 = vector.load %arg5[%c0_16, %c0_17] : memref<128x128xf32, #tpu.memory_space<vmem>>, vector<128x128xf32>
    tpu.vector_store %arg5[%c0_16, %c0_17], %22 {strides = array<i32>} : memref<128x128xf32, #tpu.memory_space<vmem>>, vector<128x128xf32>,
    return
  }
  func.func @transform_0(%arg0: i32) -> (i32, i32) {
    %c0_i32 = arith.constant 0 : i32
    %c0_i32_0 = arith.constant 0 : i32
    return %arg0, %c0_i32 : i32, i32
  }
  func.func @transform_1(%arg0: i32) -> (i32, i32) {
    %c0_i32 = arith.constant 0 : i32
    %c0_i32_0 = arith.constant 0 : i32
    return %arg0, %c0_i32 : i32, i32
  }
  func.func @transform_2(%arg0: i32) -> (i32, i32) {
    %c0_i32 = arith.constant 0 : i32
    %c0_i32_0 = arith.constant 0 : i32
    %c0_i32_1 = arith.constant 0 : i32
    return %c0_i32, %c0_i32_0 : i32, i32
  }
  func.func @transform_3(%arg0: i32) -> (i32, i32) {
    %c0_i32 = arith.constant 0 : i32
    %c0_i32_0 = arith.constant 0 : i32
    %c0_i32_1 = arith.constant 0 : i32
    return %c0_i32, %c0_i32_0 : i32, i32
  }
  func.func @transform_4(%arg0: i32) -> (i32, i32) {
    %c0_i32 = arith.constant 0 : i32
    %c0_i32_0 = arith.constant 0 : i32
    return %arg0, %c0_i32 : i32, i32
  }
}

</mosaic_0001>

<llo_original>
// kernel: tpu_custom_call.1
$region0: #{tpu_custom_call.1}
  #allocation0 [shape = 'u32[]', space=smem, size = 0x4, offset = 0x4, fixed_abs, tag = 'smem constant byte address 0x4 - core index']
  #allocation1 [shape = 'u32[72,128]{1,0:T(1,128)}', space=vmem, size = 0x9000, scoped, tag = 'internal scratch']
  %s0 = inlined_call_operand.hbm [shape: f32[256,128], index: 0, kind: input, shape index: {}]
  %s1 = inlined_call_operand.hbm [shape: f32[256,1024], index: 1, kind: input, shape index: {}]
  %s2 = inlined_call_operand.hbm [shape: f32[128,128], index: 2, kind: input, shape index: {}]
  %s3 = inlined_call_operand.hbm [shape: f32[128,128], index: 3, kind: input, shape index: {}]
  %s4 = inlined_call_operand.hbm [shape: f32[256,128], index: 4, kind: output, shape index: {}]
  %s5 = sld [smem:[#allocation0]]
  $region65: #{tpu_custom_call.1} parent=0
    _
  %s7 = ssub.s32 1, %s5
  %s8 = scalar_select 0, %s7, %s5
  $region1: #{tpu_custom_call.1} parent=0
    #allocation2 [shape = 'u8[131072]{0}', space=vmem, size = 0x20000, scoped, tag = 'input window, operand 0']
    #allocation3 [shape = 's32[2]{0}', space=sflag, size = 0x8, scoped, tag = 'scoped memory for tpu_custom_call.1']
    #allocation4 [shape = 's32[2]{0}', space=sflag, size = 0x8, scoped, tag = 'scoped memory for tpu_custom_call.1']
    #allocation5 [shape = 'u8[1048576]{0}', space=vmem, size = 0x100000, scoped, tag = 'input window, operand 1']
    #allocation6 [shape = 's32[2]{0}', space=sflag, size = 0x8, scoped, tag = 'scoped memory for tpu_custom_call.1']
    #allocation7 [shape = 'u8[65536]{0}', space=vmem, size = 0x10000, scoped, tag = 'input window, operand 2, single buffered']
    #allocation8 [shape = 'u8[65536]{0}', space=vmem, size = 0x10000, scoped, tag = 'input window, operand 3, single buffered']
    #allocation9 [shape = 's32[1]{0}', space=sflag, size = 0x4, scoped, tag = 'scoped memory for tpu_custom_call.1']
    #allocation10 [shape = 'u8[131072]{0}', space=vmem, size = 0x20000, scoped, tag = 'output window, operand 0']
    %9 = vsyncpa [#allocation3], 0
    %s10 = scalar_lea.sflag [#allocation3], 1
    %11 = vsyncpa %s10, 0
    %12 = vsyncpa [#allocation6], 0
    %s13 = scalar_lea.sflag [#allocation6], 1
    %14 = vsyncpa %s13, 0
    %15 = vsyncpa [#allocation9], 0
    %16 = vsyncpa [#allocation4], 0
    %s17 = scalar_lea.sflag [#allocation4], 1
    %18 = vsyncpa %s17, 0
    loop: start=0, step=1, limit=4
    $region2: #{tpu_custom_call.1} parent=1 // loop_pre_header
      _
    $region3: #{tpu_custom_call.1} parent=1 // loop_header
      %s20 = sphi 0, %s24
      %p21 = scmp.ge.s32.totalorder %s20, 4
      %s30 = sphi 0, %s32
      %s33 = sphi 0, %s30
      %s34 = sphi 0, %s33
      %s50 = sphi 0, %s34
      %s56 = sphi 0, %s58
      %s59 = sphi 0, %s56
      %s60 = sphi 0, %s59
      %s76 = sphi 0, %s60
      %s80 = sphi 0, %s80
      %s82 = sphi 0, %s80
      %s83 = sphi 0, %s82
      %s97 = sphi 0, %s83
      %s101 = sphi 0, %s101
      %s103 = sphi 0, %s101
      %s104 = sphi 0, %s103
      %s118 = sphi 0, %s104
      %s124 = sphi 0, %s126
      %s127 = sphi 0, %s124
      %s128 = sphi 0, %s127
      %s144 = sphi 0, %s128
    $region4: #{tpu_custom_call.1} parent=1 // loop_header_branch
      %23 = sbr.rel (%p21) target = $region8
    $region5: #{tpu_custom_call.1} parent=1 // loop_body
      %s25 = ssub.s32 %s20, 1
      %s26 = ssub.s32 %s20, 2
      %s27 = sadd.s32 %s20, 1
      %s28 = ssub.s32 %s20, %s27
      %p29 = scmp.eq.s32.totalorder %s28, 0
      %s31 = sadd.s32 %s30, 1
      %s32 = scalar_select %p29, %s30, %s31
      %p35 = pneg %p29
      %p36 = scmp.eq.s32.totalorder %s20, 1
      %p37 = por %p35, %p36
      %p38 = scmp.ne.s32.totalorder %s30, %s33
      %p39 = scmp.eq.s32.totalorder %s20, 0
      %p40 = por %p38, %p39
      %p41 = scmp.ne.s32.totalorder %s30, %s33
      %p42 = scmp.eq.s32.totalorder %s25, 1
      %p43 = por %p41, %p42
      %p44 = scmp.ne.s32.totalorder %s33, %s34
      %p45 = scmp.eq.s32.totalorder %s25, 0
      %p46 = por %p44, %p45
      %p47 = scmp.ne.s32.totalorder %s33, %s34
      %p48 = scmp.eq.s32.totalorder %s26, 1
      %p49 = por %p47, %p48
      %p51 = scmp.ne.s32.totalorder %s34, %s50
      %p52 = scmp.eq.s32.totalorder %s26, 0
      %p53 = por %p51, %p52
      %s54 = ssub.s32 %s20, %s27
      %p55 = scmp.eq.s32.totalorder %s54, 0
      %s57 = sadd.s32 %s56, 1
      %s58 = scalar_select %p55, %s56, %s57
      %p61 = pneg %p55
      %p62 = scmp.eq.s32.totalorder %s20, 1
      %p63 = por %p61, %p62
      %p64 = scmp.ne.s32.totalorder %s56, %s59
      %p65 = scmp.eq.s32.totalorder %s20, 0
      %p66 = por %p64, %p65
      %p67 = scmp.ne.s32.totalorder %s56, %s59
      %p68 = scmp.eq.s32.totalorder %s25, 1
      %p69 = por %p67, %p68
      %p70 = scmp.ne.s32.totalorder %s59, %s60
      %p71 = scmp.eq.s32.totalorder %s25, 0
      %p72 = por %p70, %p71
      %p73 = scmp.ne.s32.totalorder %s59, %s60
      %p74 = scmp.eq.s32.totalorder %s26, 1
      %p75 = por %p73, %p74
      %p77 = scmp.ne.s32.totalorder %s60, %s76
      %p78 = scmp.eq.s32.totalorder %s26, 0
      %p79 = por %p77, %p78
      %s81 = sadd.s32 %s80, 1
      %p84 = scmp.eq.s32.totalorder %s20, 1
      %p85 = scmp.ne.s32.totalorder %s80, %s82
      %p86 = scmp.eq.s32.totalorder %s20, 0
      %p87 = por %p85, %p86
      %p88 = scmp.ne.s32.totalorder %s80, %s82
      %p89 = scmp.eq.s32.totalorder %s25, 1
      %p90 = por %p88, %p89
      %p91 = scmp.ne.s32.totalorder %s82, %s83
      %p92 = scmp.eq.s32.totalorder %s25, 0
      %p93 = por %p91, %p92
      %p94 = scmp.ne.s32.totalorder %s82, %s83
      %p95 = scmp.eq.s32.totalorder %s26, 1
      %p96 = por %p94, %p95
      %p98 = scmp.ne.s32.totalorder %s83, %s97
      %p99 = scmp.eq.s32.totalorder %s26, 0
      %p100 = por %p98, %p99
      %s102 = sadd.s32 %s101, 1
      %p105 = scmp.eq.s32.totalorder %s20, 1
      %p106 = scmp.ne.s32.totalorder %s101, %s103
      %p107 = scmp.eq.s32.totalorder %s20, 0
      %p108 = por %p106, %p107
      %p109 = scmp.ne.s32.totalorder %s101, %s103
      %p110 = scmp.eq.s32.totalorder %s25, 1
      %p111 = por %p109, %p110
      %p112 = scmp.ne.s32.totalorder %s103, %s104
      %p113 = scmp.eq.s32.totalorder %s25, 0
      %p114 = por %p112, %p113
      %p115 = scmp.ne.s32.totalorder %s103, %s104
      %p116 = scmp.eq.s32.totalorder %s26, 1
      %p117 = por %p115, %p116
      %p119 = scmp.ne.s32.totalorder %s104, %s118
      %p120 = scmp.eq.s32.totalorder %s26, 0
      %p121 = por %p119, %p120
      %s122 = ssub.s32 %s20, %s27
      %p123 = scmp.eq.s32.totalorder %s122, 0
      %s125 = sadd.s32 %s124, 1
      %s126 = scalar_select %p123, %s124, %s125
      %p129 = pneg %p123
      %p130 = scmp.eq.s32.totalorder %s20, 1
      %p131 = por %p129, %p130
      %p132 = scmp.ne.s32.totalorder %s124, %s127
      %p133 = scmp.eq.s32.totalorder %s20, 0
      %p134 = por %p132, %p133
      %p135 = scmp.ne.s32.totalorder %s124, %s127
      %p136 = scmp.eq.s32.totalorder %s25, 1
      %p137 = por %p135, %p136
      %p138 = scmp.ne.s32.totalorder %s127, %s128
      %p139 = scmp.eq.s32.totalorder %s25, 0
      %p140 = por %p138, %p139
      %p141 = scmp.ne.s32.totalorder %s127, %s128
      %p142 = scmp.eq.s32.totalorder %s26, 1
      %p143 = por %p141, %p142
      %p145 = scmp.ne.s32.totalorder %s128, %s144
      %p146 = scmp.eq.s32.totalorder %s26, 0
      %p147 = por %p145, %p146
      %p148 = scmp.le.s32.totalorder 1, %s20
      %p149 = scmp.lt.s32.totalorder %s20, 3
      %p150 = pnand %p148, %p149
      %p151 = pneg %p150
      // Predicated region
      $region9: #{tpu_custom_call.1} parent=5 // pred_check
        _
      $region10: #{tpu_custom_call.1} parent=5 // pred_check_branch
        %153 = sbr.rel (%p150) target = $region12
      $region11: #{tpu_custom_call.1} parent=5 // pred_region
        %s154 = ssub.s32 %s20, 1
        // Predicated region
        $region13: #{tpu_custom_call.1} parent=11 // pred_check
          %p155 = pneg %p93
        $region14: #{tpu_custom_call.1} parent=11 // pred_check_branch
          %157 = sbr.rel (%p155) target = $region16
        $region15: #{tpu_custom_call.1} parent=11 // pred_region
          %159 = vsyncadd [#allocation6], 0
          %s160 = sshll.u32 %s2, 4
          %s161 = int_to_ptr.hbm [resolvable:$true] %s160
          %s162 = sshll.u32 [#allocation7], 4
          %s163 = int_to_ptr.vmem [resolvable:$true] %s162
          %168 = dma.hbm_to_vmem [thread:$0]  %s161, 2048, %s163, [#allocation6], 128, 128, 8
        $region16: #{tpu_custom_call.1} parent=11 // pred_fallthru
          _
        // Predicated region
        $region17: #{tpu_custom_call.1} parent=11 // pred_check
          %p169 = pneg %p114
        $region18: #{tpu_custom_call.1} parent=11 // pred_check_branch
          %171 = sbr.rel (%p169) target = $region20
        $region19: #{tpu_custom_call.1} parent=11 // pred_region
          %173 = vsyncadd [#allocation9], 0
          %s174 = sshll.u32 %s3, 4
          %s175 = int_to_ptr.hbm [resolvable:$true] %s174
          %s176 = sshll.u32 [#allocation8], 4
          %s177 = int_to_ptr.vmem [resolvable:$true] %s176
          %182 = dma.hbm_to_vmem [thread:$0]  %s175, 2048, %s177, [#allocation9], 128, 128, 8
        $region20: #{tpu_custom_call.1} parent=11 // pred_fallthru
          _
      $region12: #{tpu_custom_call.1} parent=5 // pred_fallthru
        _
      %p183 = scmp.lt.s32.totalorder %s20, 2
      // Predicated region
      $region21: #{tpu_custom_call.1} parent=5 // pred_check
        %p184 = pneg %p183
      $region22: #{tpu_custom_call.1} parent=5 // pred_check_branch
        %186 = sbr.rel (%p184) target = $region24
      $region23: #{tpu_custom_call.1} parent=5 // pred_region
        // Predicated region
        $region25: #{tpu_custom_call.1} parent=23 // pred_check
          %p187 = pneg %p40
        $region26: #{tpu_custom_call.1} parent=23 // pred_check_branch
          %189 = sbr.rel (%p187) target = $region28
        $region27: #{tpu_custom_call.1} parent=23 // pred_region
          %s190 = sand.u32 %s30, 1
          %s191 = scalar_lea.sflag [#allocation3], %s190
          %s192 = sand.u32 %s30, 1
          %s193 = smul.addr %s192, 128
          %s194 = scalar_lea.vmem [#allocation2], %s193
          %s195 = smul.u32 16, %s20
          %197 = vsyncadd %s191, 0
          %s198 = smul.addr %s195, 8
          %s199 = scalar_lea.hbm %s0, %s198
          %s200 = sshll.u32 %s199, 4
          %s201 = int_to_ptr.hbm [resolvable:$true] %s200
          %s202 = sshll.u32 %s194, 4
          %s203 = int_to_ptr.vmem [resolvable:$true] %s202
          %208 = dma.hbm_to_vmem [thread:$0]  %s201, 2048, %s203, %s191, 128, 128, 8
        $region28: #{tpu_custom_call.1} parent=23 // pred_fallthru
          _
        // Predicated region
        $region29: #{tpu_custom_call.1} parent=23 // pred_check
          %p209 = pneg %p66
        $region30: #{tpu_custom_call.1} parent=23 // pred_check_branch
          %211 = sbr.rel (%p209) target = $region32
        $region31: #{tpu_custom_call.1} parent=23 // pred_region
          %s212 = sand.u32 %s20, 1
          %s213 = scalar_lea.sflag [#allocation6], %s212
          %s214 = sand.u32 %s56, 1
          %s215 = smul.addr %s214, 1024
          %s216 = scalar_lea.vmem [#allocation5], %s215
          %s217 = smul.u32 16, %s20
          %219 = vsyncadd %s213, 0
          %s220 = smul.addr %s217, 8
          %s221 = smul.addr %s220, 8
          %s222 = scalar_lea.hbm %s1, %s221
          %s223 = sshll.u32 %s222, 4
          %s224 = int_to_ptr.hbm [resolvable:$true] %s223
          %s225 = sshll.u32 %s216, 4
          %s226 = int_to_ptr.vmem [resolvable:$true] %s225
          %231 = dma.hbm_to_vmem [thread:$0]  %s224, 16384, %s226, %s213, 1024, 1024, 64
        $region32: #{tpu_custom_call.1} parent=23 // pred_fallthru
          _
      $region24: #{tpu_custom_call.1} parent=5 // pred_fallthru
        _
      %p232 = scmp.le.s32.totalorder 1, %s20
      %p233 = scmp.lt.s32.totalorder %s20, 3
      %p234 = pnand %p232, %p233
      %p235 = pneg %p234
      // Predicated region
      $region33: #{tpu_custom_call.1} parent=5 // pred_check
        _
      $region34: #{tpu_custom_call.1} parent=5 // pred_check_branch
        %237 = sbr.rel (%p234) target = $region36
      $region35: #{tpu_custom_call.1} parent=5 // pred_region
        %s238 = ssub.s32 %s20, 1
        %s239 = sand.u32 %s33, 1
        %s240 = scalar_lea.sflag [#allocation3], %s239
        %s241 = sand.u32 %s33, 1
        %s242 = smul.addr %s241, 128
        %s243 = scalar_lea.vmem [#allocation2], %s242
        // Predicated region
        $region37: #{tpu_custom_call.1} parent=35 // pred_check
          %p244 = pneg %p46
        $region38: #{tpu_custom_call.1} parent=35 // pred_check_branch
          %246 = sbr.rel (%p244) target = $region40
        $region39: #{tpu_custom_call.1} parent=35 // pred_region
          %248 = dma.done %s240, 2048
        $region40: #{tpu_custom_call.1} parent=35 // pred_fallthru
          _
        %s249 = sand.u32 %s25, 1
        %s250 = scalar_lea.sflag [#allocation6], %s249
        %s251 = sand.u32 %s59, 1
        %s252 = smul.addr %s251, 1024
        %s253 = scalar_lea.vmem [#allocation5], %s252
        // Predicated region
        $region41: #{tpu_custom_call.1} parent=35 // pred_check
          %p254 = pneg %p72
        $region42: #{tpu_custom_call.1} parent=35 // pred_check_branch
          %256 = sbr.rel (%p254) target = $region44
        $region43: #{tpu_custom_call.1} parent=35 // pred_region
          %258 = dma.done %s250, 16384
        $region44: #{tpu_custom_call.1} parent=35 // pred_fallthru
          _
        // Predicated region
        $region45: #{tpu_custom_call.1} parent=35 // pred_check
          %p259 = pneg %p93
        $region46: #{tpu_custom_call.1} parent=35 // pred_check_branch
          %261 = sbr.rel (%p259) target = $region48
        $region47: #{tpu_custom_call.1} parent=35 // pred_region
          %263 = dma.done [#allocation6], 2048
        $region48: #{tpu_custom_call.1} parent=35 // pred_fallthru
          _
        // Predicated region
        $region49: #{tpu_custom_call.1} parent=35 // pred_check
          %p264 = pneg %p114
        $region50: #{tpu_custom_call.1} parent=35 // pred_check_branch
          %266 = sbr.rel (%p264) target = $region52
        $region51: #{tpu_custom_call.1} parent=35 // pred_region
          %268 = dma.done [#allocation9], 2048
        $region52: #{tpu_custom_call.1} parent=35 // pred_fallthru
          _
        %s269 = sand.u32 %s33, 1
        %s270 = scalar_lea.sflag [#allocation3], %s269
        %s271 = sand.u32 %s33, 1
        %s272 = smul.addr %s271, 128
        %s273 = scalar_lea.vmem [#allocation2], %s272
        %p274 = pneg %p46
        %p275 = pneg %p43
        %s276 = sand.u32 %s25, 1
        %s277 = scalar_lea.sflag [#allocation6], %s276
        %s278 = sand.u32 %s59, 1
        %s279 = smul.addr %s278, 1024
        %s280 = scalar_lea.vmem [#allocation5], %s279
        %p281 = pneg %p72
        %p282 = pneg %p69
        %p283 = pneg %p93
        %p284 = pneg %p90
        %p285 = pneg %p114
        %p286 = pneg %p111
        %p287 = pneg %p140
        %p288 = pneg %p137
        %s289 = sand.u32 %s127, 1
        %s290 = scalar_lea.sflag [#allocation4], %s289
        %s291 = sand.u32 %s127, 1
        %s292 = smul.addr %s291, 128
        %s293 = scalar_lea.vmem [#allocation10], %s292
        %s294 = smul.u32 16, %s25
        %s295 = smul.u32 16, %s25
        %s296 = smul.u32 16, %s25
        %v297 = vld [vmem:[%s253] sm:$0xff]
        %v298 = vld [vmem:[%s253 + $0x40] sm:$0xff]
        %v299 = vld [vmem:[%s253 + $0x80] sm:$0xff]
        %v300 = vld [vmem:[%s253 + $0xc0] sm:$0xff]
        %v301 = vld [vmem:[%s253 + $0x100] sm:$0xff]
        %v302 = vld [vmem:[%s253 + $0x140] sm:$0xff]
        %v303 = vld [vmem:[%s253 + $0x180] sm:$0xff]
        %v304 = vld [vmem:[%s253 + $0x1c0] sm:$0xff]
        %v305 = vld [vmem:[%s253 + $0x200] sm:$0xff]
        %v306 = vld [vmem:[%s253 + $0x240] sm:$0xff]
        %v307 = vld [vmem:[%s253 + $0x280] sm:$0xff]
        %v308 = vld [vmem:[%s253 + $0x2c0] sm:$0xff]
        %v309 = vld [vmem:[%s253 + $0x300] sm:$0xff]
        %v310 = vld [vmem:[%s253 + $0x340] sm:$0xff]
        %v311 = vld [vmem:[%s253 + $0x380] sm:$0xff]
        %v312 = vld [vmem:[%s253 + $0x3c0] sm:$0xff]
        %v313 = vld [vmem:[%s253 + $0x8] sm:$0xff]
        %v314 = vld [vmem:[%s253 + $0x48] sm:$0xff]
        %v315 = vld [vmem:[%s253 + $0x88] sm:$0xff]
        %v316 = vld [vmem:[%s253 + $0xc8] sm:$0xff]
        %v317 = vld [vmem:[%s253 + $0x108] sm:$0xff]
        %v318 = vld [vmem:[%s253 + $0x148] sm:$0xff]
        %v319 = vld [vmem:[%s253 + $0x188] sm:$0xff]
        %v320 = vld [vmem:[%s253 + $0x1c8] sm:$0xff]
        %v321 = vld [vmem:[%s253 + $0x208] sm:$0xff]
        %v322 = vld [vmem:[%s253 + $0x248] sm:$0xff]
        %v323 = vld [vmem:[%s253 + $0x288] sm:$0xff]
        %v324 = vld [vmem:[%s253 + $0x2c8] sm:$0xff]
        %v325 = vld [vmem:[%s253 + $0x308] sm:$0xff]
        %v326 = vld [vmem:[%s253 + $0x348] sm:$0xff]
        %v327 = vld [vmem:[%s253 + $0x388] sm:$0xff]
        %v328 = vld [vmem:[%s253 + $0x3c8] sm:$0xff]
        %v329 = vadd.f32 %v297, %v313
        %v330 = vadd.f32 %v298, %v314
        %v331 = vadd.f32 %v299, %v315
        %v332 = vadd.f32 %v300, %v316
        %v333 = vadd.f32 %v301, %v317
        %v334 = vadd.f32 %v302, %v318
        %v335 = vadd.f32 %v303, %v319
        %v336 = vadd.f32 %v304, %v320
        %v337 = vadd.f32 %v305, %v321
        %v338 = vadd.f32 %v306, %v322
        %v339 = vadd.f32 %v307, %v323
        %v340 = vadd.f32 %v308, %v324
        %v341 = vadd.f32 %v309, %v325
        %v342 = vadd.f32 %v310, %v326
        %v343 = vadd.f32 %v311, %v327
        %v344 = vadd.f32 %v312, %v328
        %v345 = vld [vmem:[%s253 + $0x10] sm:$0xff]
        %v346 = vld [vmem:[%s253 + $0x50] sm:$0xff]
        %v347 = vld [vmem:[%s253 + $0x90] sm:$0xff]
        %v348 = vld [vmem:[%s253 + $0xd0] sm:$0xff]
        %v349 = vld [vmem:[%s253 + $0x110] sm:$0xff]
        %v350 = vld [vmem:[%s253 + $0x150] sm:$0xff]
        %v351 = vld [vmem:[%s253 + $0x190] sm:$0xff]
        %v352 = vld [vmem:[%s253 + $0x1d0] sm:$0xff]
        %v353 = vld [vmem:[%s253 + $0x210] sm:$0xff]
        %v354 = vld [vmem:[%s253 + $0x250] sm:$0xff]
        %v355 = vld [vmem:[%s253 + $0x290] sm:$0xff]
        %v356 = vld [vmem:[%s253 + $0x2d0] sm:$0xff]
        %v357 = vld [vmem:[%s253 + $0x310] sm:$0xff]
        %v358 = vld [vmem:[%s253 + $0x350] sm:$0xff]
        %v359 = vld [vmem:[%s253 + $0x390] sm:$0xff]
        %v360 = vld [vmem:[%s253 + $0x3d0] sm:$0xff]
        %v361 = vadd.f32 %v329, %v345
        %v362 = vadd.f32 %v330, %v346
        %v363 = vadd.f32 %v331, %v347
        %v364 = vadd.f32 %v332, %v348
        %v365 = vadd.f32 %v333, %v349
        %v366 = vadd.f32 %v334, %v350
        %v367 = vadd.f32 %v335, %v351
        %v368 = vadd.f32 %v336, %v352
        %v369 = vadd.f32 %v337, %v353
        %v370 = vadd.f32 %v338, %v354
        %v371 = vadd.f32 %v339, %v355
        %v372 = vadd.f32 %v340, %v356
        %v373 = vadd.f32 %v341, %v357
        %v374 = vadd.f32 %v342, %v358
        %v375 = vadd.f32 %v343, %v359
        %v376 = vadd.f32 %v344, %v360
        %v377 = vld [vmem:[%s253 + $0x18] sm:$0xff]
        %v378 = vld [vmem:[%s253 + $0x58] sm:$0xff]
        %v379 = vld [vmem:[%s253 + $0x98] sm:$0xff]
        %v380 = vld [vmem:[%s253 + $0xd8] sm:$0xff]
        %v381 = vld [vmem:[%s253 + $0x118] sm:$0xff]
        %v382 = vld [vmem:[%s253 + $0x158] sm:$0xff]
        %v383 = vld [vmem:[%s253 + $0x198] sm:$0xff]
        %v384 = vld [vmem:[%s253 + $0x1d8] sm:$0xff]
        %v385 = vld [vmem:[%s253 + $0x218] sm:$0xff]
        %v386 = vld [vmem:[%s253 + $0x258] sm:$0xff]
        %v387 = vld [vmem:[%s253 + $0x298] sm:$0xff]
        %v388 = vld [vmem:[%s253 + $0x2d8] sm:$0xff]
        %v389 = vld [vmem:[%s253 + $0x318] sm:$0xff]
        %v390 = vld [vmem:[%s253 + $0x358] sm:$0xff]
        %v391 = vld [vmem:[%s253 + $0x398] sm:$0xff]
        %v392 = vld [vmem:[%s253 + $0x3d8] sm:$0xff]
        %v393 = vadd.f32 %v361, %v377
        %v394 = vadd.f32 %v362, %v378
        %v395 = vadd.f32 %v363, %v379
        %v396 = vadd.f32 %v364, %v380
        %v397 = vadd.f32 %v365, %v381
        %v398 = vadd.f32 %v366, %v382
        %v399 = vadd.f32 %v367, %v383
        %v400 = vadd.f32 %v368, %v384
        %v401 = vadd.f32 %v369, %v385
        %v402 = vadd.f32 %v370, %v386
        %v403 = vadd.f32 %v371, %v387
        %v404 = vadd.f32 %v372, %v388
        %v405 = vadd.f32 %v373, %v389
        %v406 = vadd.f32 %v374, %v390
        %v407 = vadd.f32 %v375, %v391
        %v408 = vadd.f32 %v376, %v392
        %v409 = vld [vmem:[%s253 + $0x20] sm:$0xff]
        %v410 = vld [vmem:[%s253 + $0x60] sm:$0xff]
        %v411 = vld [vmem:[%s253 + $0xa0] sm:$0xff]
        %v412 = vld [vmem:[%s253 + $0xe0] sm:$0xff]
        %v413 = vld [vmem:[%s253 + $0x120] sm:$0xff]
        %v414 = vld [vmem:[%s253 + $0x160] sm:$0xff]
        %v415 = vld [vmem:[%s253 + $0x1a0] sm:$0xff]
        %v416 = vld [vmem:[%s253 + $0x1e0] sm:$0xff]
        %v417 = vld [vmem:[%s253 + $0x220] sm:$0xff]
        %v418 = vld [vmem:[%s253 + $0x260] sm:$0xff]
        %v419 = vld [vmem:[%s253 + $0x2a0] sm:$0xff]
        %v420 = vld [vmem:[%s253 + $0x2e0] sm:$0xff]
        %v421 = vld [vmem:[%s253 + $0x320] sm:$0xff]
        %v422 = vld [vmem:[%s253 + $0x360] sm:$0xff]
        %v423 = vld [vmem:[%s253 + $0x3a0] sm:$0xff]
        %v424 = vld [vmem:[%s253 + $0x3e0] sm:$0xff]
        %v425 = vadd.f32 %v393, %v409
        %v426 = vadd.f32 %v394, %v410
        %v427 = vadd.f32 %v395, %v411
        %v428 = vadd.f32 %v396, %v412
        %v429 = vadd.f32 %v397, %v413
        %v430 = vadd.f32 %v398, %v414
        %v431 = vadd.f32 %v399, %v415
        %v432 = vadd.f32 %v400, %v416
        %v433 = vadd.f32 %v401, %v417
        %v434 = vadd.f32 %v402, %v418
        %v435 = vadd.f32 %v403, %v419
        %v436 = vadd.f32 %v404, %v420
        %v437 = vadd.f32 %v405, %v421
        %v438 = vadd.f32 %v406, %v422
        %v439 = vadd.f32 %v407, %v423
        %v440 = vadd.f32 %v408, %v424
        %v441 = vld [vmem:[%s253 + $0x28] sm:$0xff]
        %v442 = vld [vmem:[%s253 + $0x68] sm:$0xff]
        %v443 = vld [vmem:[%s253 + $0xa8] sm:$0xff]
        %v444 = vld [vmem:[%s253 + $0xe8] sm:$0xff]
        %v445 = vld [vmem:[%s253 + $0x128] sm:$0xff]
        %v446 = vld [vmem:[%s253 + $0x168] sm:$0xff]
        %v447 = vld [vmem:[%s253 + $0x1a8] sm:$0xff]
        %v448 = vld [vmem:[%s253 + $0x1e8] sm:$0xff]
        %v449 = vld [vmem:[%s253 + $0x228] sm:$0xff]
        %v450 = vld [vmem:[%s253 + $0x268] sm:$0xff]
        %v451 = vld [vmem:[%s253 + $0x2a8] sm:$0xff]
        %v452 = vld [vmem:[%s253 + $0x2e8] sm:$0xff]
        %v453 = vld [vmem:[%s253 + $0x328] sm:$0xff]
        %v454 = vld [vmem:[%s253 + $0x368] sm:$0xff]
        %v455 = vld [vmem:[%s253 + $0x3a8] sm:$0xff]
        %v456 = vld [vmem:[%s253 + $0x3e8] sm:$0xff]
        %v457 = vadd.f32 %v425, %v441
        %v458 = vadd.f32 %v426, %v442
        %v459 = vadd.f32 %v427, %v443
        %v460 = vadd.f32 %v428, %v444
        %v461 = vadd.f32 %v429, %v445
        %v462 = vadd.f32 %v430, %v446
        %v463 = vadd.f32 %v431, %v447
        %v464 = vadd.f32 %v432, %v448
        %v465 = vadd.f32 %v433, %v449
        %v466 = vadd.f32 %v434, %v450
        %v467 = vadd.f32 %v435, %v451
        %v468 = vadd.f32 %v436, %v452
        %v469 = vadd.f32 %v437, %v453
        %v470 = vadd.f32 %v438, %v454
        %v471 = vadd.f32 %v439, %v455
        %v472 = vadd.f32 %v440, %v456
        %v473 = vld [vmem:[%s253 + $0x30] sm:$0xff]
        %v474 = vld [vmem:[%s253 + $0x70] sm:$0xff]
        %v475 = vld [vmem:[%s253 + $0xb0] sm:$0xff]
        %v476 = vld [vmem:[%s253 + $0xf0] sm:$0xff]
        %v477 = vld [vmem:[%s253 + $0x130] sm:$0xff]
        %v478 = vld [vmem:[%s253 + $0x170] sm:$0xff]
        %v479 = vld [vmem:[%s253 + $0x1b0] sm:$0xff]
        %v480 = vld [vmem:[%s253 + $0x1f0] sm:$0xff]
        %v481 = vld [vmem:[%s253 + $0x230] sm:$0xff]
        %v482 = vld [vmem:[%s253 + $0x270] sm:$0xff]
        %v483 = vld [vmem:[%s253 + $0x2b0] sm:$0xff]
        %v484 = vld [vmem:[%s253 + $0x2f0] sm:$0xff]
        %v485 = vld [vmem:[%s253 + $0x330] sm:$0xff]
        %v486 = vld [vmem:[%s253 + $0x370] sm:$0xff]
        %v487 = vld [vmem:[%s253 + $0x3b0] sm:$0xff]
        %v488 = vld [vmem:[%s253 + $0x3f0] sm:$0xff]
        %v489 = vadd.f32 %v457, %v473
        %v490 = vadd.f32 %v458, %v474
        %v491 = vadd.f32 %v459, %v475
        %v492 = vadd.f32 %v460, %v476
        %v493 = vadd.f32 %v461, %v477
        %v494 = vadd.f32 %v462, %v478
        %v495 = vadd.f32 %v463, %v479
        %v496 = vadd.f32 %v464, %v480
        %v497 = vadd.f32 %v465, %v481
        %v498 = vadd.f32 %v466, %v482
        %v499 = vadd.f32 %v467, %v483
        %v500 = vadd.f32 %v468, %v484
        %v501 = vadd.f32 %v469, %v485
        %v502 = vadd.f32 %v470, %v486
        %v503 = vadd.f32 %v471, %v487
        %v504 = vadd.f32 %v472, %v488
        %v505 = vld [vmem:[%s253 + $0x38] sm:$0xff]
        %v506 = vld [vmem:[%s253 + $0x78] sm:$0xff]
        %v507 = vld [vmem:[%s253 + $0xb8] sm:$0xff]
        %v508 = vld [vmem:[%s253 + $0xf8] sm:$0xff]
        %v509 = vld [vmem:[%s253 + $0x138] sm:$0xff]
        %v510 = vld [vmem:[%s253 + $0x178] sm:$0xff]
        %v511 = vld [vmem:[%s253 + $0x1b8] sm:$0xff]
        %v512 = vld [vmem:[%s253 + $0x1f8] sm:$0xff]
        %v513 = vld [vmem:[%s253 + $0x238] sm:$0xff]
        %v514 = vld [vmem:[%s253 + $0x278] sm:$0xff]
        %v515 = vld [vmem:[%s253 + $0x2b8] sm:$0xff]
        %v516 = vld [vmem:[%s253 + $0x2f8] sm:$0xff]
        %v517 = vld [vmem:[%s253 + $0x338] sm:$0xff]
        %v518 = vld [vmem:[%s253 + $0x378] sm:$0xff]
        %v519 = vld [vmem:[%s253 + $0x3b8] sm:$0xff]
        %v520 = vld [vmem:[%s253 + $0x3f8] sm:$0xff]
        %v521 = vadd.f32 %v489, %v505
        %v522 = vadd.f32 %v490, %v506
        %v523 = vadd.f32 %v491, %v507
        %v524 = vadd.f32 %v492, %v508
        %v525 = vadd.f32 %v493, %v509
        %v526 = vadd.f32 %v494, %v510
        %v527 = vadd.f32 %v495, %v511
        %v528 = vadd.f32 %v496, %v512
        %v529 = vadd.f32 %v497, %v513
        %v530 = vadd.f32 %v498, %v514
        %v531 = vadd.f32 %v499, %v515
        %v532 = vadd.f32 %v500, %v516
        %v533 = vadd.f32 %v501, %v517
        %v534 = vadd.f32 %v502, %v518
        %v535 = vadd.f32 %v503, %v519
        %v536 = vadd.f32 %v504, %v520
        %v537 = vld [vmem:[%s243] sm:$0xff]
        %v538 = vld [vmem:[%s243 + $0x8] sm:$0xff]
        %v539 = vld [vmem:[%s243 + $0x10] sm:$0xff]
        %v540 = vld [vmem:[%s243 + $0x18] sm:$0xff]
        %v541 = vld [vmem:[%s243 + $0x20] sm:$0xff]
        %v542 = vld [vmem:[%s243 + $0x28] sm:$0xff]
        %v543 = vld [vmem:[%s243 + $0x30] sm:$0xff]
        %v544 = vld [vmem:[%s243 + $0x38] sm:$0xff]
        %v545 = vld [vmem:[%s243 + $0x40] sm:$0xff]
        %v546 = vld [vmem:[%s243 + $0x48] sm:$0xff]
        %v547 = vld [vmem:[%s243 + $0x50] sm:$0xff]
        %v548 = vld [vmem:[%s243 + $0x58] sm:$0xff]
        %v549 = vld [vmem:[%s243 + $0x60] sm:$0xff]
        %v550 = vld [vmem:[%s243 + $0x68] sm:$0xff]
        %v551 = vld [vmem:[%s243 + $0x70] sm:$0xff]
        %v552 = vld [vmem:[%s243 + $0x78] sm:$0xff]
        %v553 = vld [vmem:[#allocation7] sm:$0xff]
        %v554 = vld [vmem:[#allocation7 + $0x8] sm:$0xff]
        %v555 = vld [vmem:[#allocation7 + $0x10] sm:$0xff]
        %v556 = vld [vmem:[#allocation7 + $0x18] sm:$0xff]
        %v557 = vld [vmem:[#allocation7 + $0x20] sm:$0xff]
        %v558 = vld [vmem:[#allocation7 + $0x28] sm:$0xff]
        %v559 = vld [vmem:[#allocation7 + $0x30] sm:$0xff]
        %v560 = vld [vmem:[#allocation7 + $0x38] sm:$0xff]
        %v561 = vld [vmem:[#allocation7 + $0x40] sm:$0xff]
        %v562 = vld [vmem:[#allocation7 + $0x48] sm:$0xff]
        %v563 = vld [vmem:[#allocation7 + $0x50] sm:$0xff]
        %v564 = vld [vmem:[#allocation7 + $0x58] sm:$0xff]
        %v565 = vld [vmem:[#allocation7 + $0x60] sm:$0xff]
        %v566 = vld [vmem:[#allocation7 + $0x68] sm:$0xff]
        %v567 = vld [vmem:[#allocation7 + $0x70] sm:$0xff]
        %v568 = vld [vmem:[#allocation7 + $0x78] sm:$0xff]
        %v569 = vld [vmem:[#allocation8] sm:$0xff]
        %v570 = vld [vmem:[#allocation8 + $0x8] sm:$0xff]
        %v571 = vld [vmem:[#allocation8 + $0x10] sm:$0xff]
        %v572 = vld [vmem:[#allocation8 + $0x18] sm:$0xff]
        %v573 = vld [vmem:[#allocation8 + $0x20] sm:$0xff]
        %v574 = vld [vmem:[#allocation8 + $0x28] sm:$0xff]
        %v575 = vld [vmem:[#allocation8 + $0x30] sm:$0xff]
        %v576 = vld [vmem:[#allocation8 + $0x38] sm:$0xff]
        %v577 = vld [vmem:[#allocation8 + $0x40] sm:$0xff]
        %v578 = vld [vmem:[#allocation8 + $0x48] sm:$0xff]
        %v579 = vld [vmem:[#allocation8 + $0x50] sm:$0xff]
        %v580 = vld [vmem:[#allocation8 + $0x58] sm:$0xff]
        %v581 = vld [vmem:[#allocation8 + $0x60] sm:$0xff]
        %v582 = vld [vmem:[#allocation8 + $0x68] sm:$0xff]
        %v583 = vld [vmem:[#allocation8 + $0x70] sm:$0xff]
        %v584 = vld [vmem:[#allocation8 + $0x78] sm:$0xff]
        %585 = vmatpush.msra.mxu0 %v584
        %586 = vmatpush.msra.mxu0 %v583
        %587 = vmatpush.msra.mxu0 %v582
        %588 = vmatpush.msra.mxu0 %v581
        %589 = vmatpush.msra.mxu0 %v580
        %590 = vmatpush.msra.mxu0 %v579
        %591 = vmatpush.msra.mxu0 %v578
        %592 = vmatpush.msra.mxu0 %v577
        %593 = vmatpush.msra.mxu0 %v576
        %594 = vmatpush.msra.mxu0 %v575
        %595 = vmatpush.msra.mxu0 %v574
        %596 = vmatpush.msra.mxu0 %v573
        %597 = vmatpush.msra.mxu0 %v572
        %598 = vmatpush.msra.mxu0 %v571
        %599 = vmatpush.msra.mxu0 %v570
        %600 = vmatpush.msra.mxu0 %v569
        %601 = vmatmul.f32.gmra.mxu0 %v521
        %v602 = vpop.f32.mrf.mxu0
        %v603 = vadd.f32 0.0, %v602
        %604 = vmatmul.f32.gmra.mxu0 %v522
        %v605 = vpop.f32.mrf.mxu0
        %v606 = vadd.f32 0.0, %v605
        %607 = vmatmul.f32.gmra.mxu0 %v523
        %v608 = vpop.f32.mrf.mxu0
        %v609 = vadd.f32 0.0, %v608
        %610 = vmatmul.f32.gmra.mxu0 %v524
        %v611 = vpop.f32.mrf.mxu0
        %v612 = vadd.f32 0.0, %v611
        %613 = vmatmul.f32.gmra.mxu0 %v525
        %v614 = vpop.f32.mrf.mxu0
        %v615 = vadd.f32 0.0, %v614
        %616 = vmatmul.f32.gmra.mxu0 %v526
        %v617 = vpop.f32.mrf.mxu0
        %v618 = vadd.f32 0.0, %v617
        %619 = vmatmul.f32.gmra.mxu0 %v527
        %v620 = vpop.f32.mrf.mxu0
        %v621 = vadd.f32 0.0, %v620
        %622 = vmatmul.f32.gmra.mxu0 %v528
        %v623 = vpop.f32.mrf.mxu0
        %v624 = vadd.f32 0.0, %v623
        %625 = vmatmul.f32.gmra.mxu0 %v529
        %v626 = vpop.f32.mrf.mxu0
        %v627 = vadd.f32 0.0, %v626
        %628 = vmatmul.f32.gmra.mxu0 %v530
        %v629 = vpop.f32.mrf.mxu0
        %v630 = vadd.f32 0.0, %v629
        %631 = vmatmul.f32.gmra.mxu0 %v531
        %v632 = vpop.f32.mrf.mxu0
        %v633 = vadd.f32 0.0, %v632
        %634 = vmatmul.f32.gmra.mxu0 %v532
        %v635 = vpop.f32.mrf.mxu0
        %v636 = vadd.f32 0.0, %v635
        %637 = vmatmul.f32.gmra.mxu0 %v533
        %v638 = vpop.f32.mrf.mxu0
        %v639 = vadd.f32 0.0, %v638
        %640 = vmatmul.f32.gmra.mxu0 %v534
        %v641 = vpop.f32.mrf.mxu0
        %v642 = vadd.f32 0.0, %v641
        %643 = vmatmul.f32.gmra.mxu0 %v535
        %v644 = vpop.f32.mrf.mxu0
        %v645 = vadd.f32 0.0, %v644
        %646 = vmatmul.f32.gmra.mxu0 %v536
        %v647 = vpop.f32.mrf.mxu0
        %v648 = vadd.f32 0.0, %v647
        %649 = vdwg.mxu0
        %650 = vmatpush.msra.mxu0 %v568
        %651 = vmatpush.msra.mxu0 %v567
        %652 = vmatpush.msra.mxu0 %v566
        %653 = vmatpush.msra.mxu0 %v565
        %654 = vmatpush.msra.mxu0 %v564
        %655 = vmatpush.msra.mxu0 %v563
        %656 = vmatpush.msra.mxu0 %v562
        %657 = vmatpush.msra.mxu0 %v561
        %658 = vmatpush.msra.mxu0 %v560
        %659 = vmatpush.msra.mxu0 %v559
        %660 = vmatpush.msra.mxu0 %v558
        %661 = vmatpush.msra.mxu0 %v557
        %662 = vmatpush.msra.mxu0 %v556
        %663 = vmatpush.msra.mxu0 %v555
        %664 = vmatpush.msra.mxu0 %v554
        %665 = vmatpush.msra.mxu0 %v553
        %666 = vmatmul.f32.gmra.mxu0 %v537
        %v667 = vpop.f32.mrf.mxu0
        %v668 = vadd.f32 %v603, %v667
        %669 = vmatmul.f32.gmra.mxu0 %v538
        %v670 = vpop.f32.mrf.mxu0
        %v671 = vadd.f32 %v606, %v670
        %672 = vmatmul.f32.gmra.mxu0 %v539
        %v673 = vpop.f32.mrf.mxu0
        %v674 = vadd.f32 %v609, %v673
        %675 = vmatmul.f32.gmra.mxu0 %v540
        %v676 = vpop.f32.mrf.mxu0
        %v677 = vadd.f32 %v612, %v676
        %678 = vmatmul.f32.gmra.mxu0 %v541
        %v679 = vpop.f32.mrf.mxu0
        %v680 = vadd.f32 %v615, %v679
        %681 = vmatmul.f32.gmra.mxu0 %v542
        %v682 = vpop.f32.mrf.mxu0
        %v683 = vadd.f32 %v618, %v682
        %684 = vmatmul.f32.gmra.mxu0 %v543
        %v685 = vpop.f32.mrf.mxu0
        %v686 = vadd.f32 %v621, %v685
        %687 = vmatmul.f32.gmra.mxu0 %v544
        %v688 = vpop.f32.mrf.mxu0
        %v689 = vadd.f32 %v624, %v688
        %690 = vmatmul.f32.gmra.mxu0 %v545
        %v691 = vpop.f32.mrf.mxu0
        %v692 = vadd.f32 %v627, %v691
        %693 = vmatmul.f32.gmra.mxu0 %v546
        %v694 = vpop.f32.mrf.mxu0
        %v695 = vadd.f32 %v630, %v694
        %696 = vmatmul.f32.gmra.mxu0 %v547
        %v697 = vpop.f32.mrf.mxu0
        %v698 = vadd.f32 %v633, %v697
        %699 = vmatmul.f32.gmra.mxu0 %v548
        %v700 = vpop.f32.mrf.mxu0
        %v701 = vadd.f32 %v636, %v700
        %702 = vmatmul.f32.gmra.mxu0 %v549
        %v703 = vpop.f32.mrf.mxu0
        %v704 = vadd.f32 %v639, %v703
        %705 = vmatmul.f32.gmra.mxu0 %v550
        %v706 = vpop.f32.mrf.mxu0
        %v707 = vadd.f32 %v642, %v706
        %708 = vmatmul.f32.gmra.mxu0 %v551
        %v709 = vpop.f32.mrf.mxu0
        %v710 = vadd.f32 %v645, %v709
        %711 = vmatmul.f32.gmra.mxu0 %v552
        %v712 = vpop.f32.mrf.mxu0
        %v713 = vadd.f32 %v648, %v712
        %714 = vdwg.mxu0
        %v715 = vmax.f32 %v668, 0.0
        %v716 = vmax.f32 %v671, 0.0
        %v717 = vmax.f32 %v674, 0.0
        %v718 = vmax.f32 %v677, 0.0
        %v719 = vmax.f32 %v680, 0.0
        %v720 = vmax.f32 %v683, 0.0
        %v721 = vmax.f32 %v686, 0.0
        %v722 = vmax.f32 %v689, 0.0
        %v723 = vmax.f32 %v692, 0.0
        %v724 = vmax.f32 %v695, 0.0
        %v725 = vmax.f32 %v698, 0.0
        %v726 = vmax.f32 %v701, 0.0
        %v727 = vmax.f32 %v704, 0.0
        %v728 = vmax.f32 %v707, 0.0
        %v729 = vmax.f32 %v710, 0.0
        %v730 = vmax.f32 %v713, 0.0
        %731 = vst [vmem:[%s293] sm:$0xff] %v715
        %732 = vst [vmem:[%s293 + $0x8] sm:$0xff] %v716
        %733 = vst [vmem:[%s293 + $0x10] sm:$0xff] %v717
        %734 = vst [vmem:[%s293 + $0x18] sm:$0xff] %v718
        %735 = vst [vmem:[%s293 + $0x20] sm:$0xff] %v719
        %736 = vst [vmem:[%s293 + $0x28] sm:$0xff] %v720
        %737 = vst [vmem:[%s293 + $0x30] sm:$0xff] %v721
        %738 = vst [vmem:[%s293 + $0x38] sm:$0xff] %v722
        %739 = vst [vmem:[%s293 + $0x40] sm:$0xff] %v723
        %740 = vst [vmem:[%s293 + $0x48] sm:$0xff] %v724
        %741 = vst [vmem:[%s293 + $0x50] sm:$0xff] %v725
        %742 = vst [vmem:[%s293 + $0x58] sm:$0xff] %v726
        %743 = vst [vmem:[%s293 + $0x60] sm:$0xff] %v727
        %744 = vst [vmem:[%s293 + $0x68] sm:$0xff] %v728
        %745 = vst [vmem:[%s293 + $0x70] sm:$0xff] %v729
        %746 = vst [vmem:[%s293 + $0x78] sm:$0xff] %v730
        %s747 = sand.u32 %s127, 1
        %s748 = scalar_lea.sflag [#allocation4], %s747
        %s749 = sand.u32 %s127, 1
        %s750 = smul.addr %s749, 128
        %s751 = scalar_lea.vmem [#allocation10], %s750
        // Predicated region
        $region53: #{tpu_custom_call.1} parent=35 // pred_check
          %p752 = pneg %p137
        $region54: #{tpu_custom_call.1} parent=35 // pred_check_branch
          %754 = sbr.rel (%p752) target = $region56
        $region55: #{tpu_custom_call.1} parent=35 // pred_region
          %s755 = smul.u32 16, %s25
          %757 = vsyncadd %s748, 0
          %s758 = smul.addr %s755, 8
          %s759 = scalar_lea.hbm %s4, %s758
          %s760 = sshll.u32 %s751, 4
          %s761 = int_to_ptr.vmem [resolvable:$true] %s760
          %s762 = sshll.u32 %s759, 4
          %s763 = int_to_ptr.hbm [resolvable:$true] %s762
          %768 = dma.vmem_to_hbm [thread:$0]  %s761, 2048, %s763, %s748, 128, 128, 8
        $region56: #{tpu_custom_call.1} parent=35 // pred_fallthru
          _
      $region36: #{tpu_custom_call.1} parent=5 // pred_fallthru
        _
      %p769 = scmp.le.s32.totalorder 2, %s20
      // Predicated region
      $region57: #{tpu_custom_call.1} parent=5 // pred_check
        %p770 = pneg %p769
      $region58: #{tpu_custom_call.1} parent=5 // pred_check_branch
        %772 = sbr.rel (%p770) target = $region60
      $region59: #{tpu_custom_call.1} parent=5 // pred_region
        %s773 = ssub.s32 %s20, 2
        // Predicated region
        $region61: #{tpu_custom_call.1} parent=59 // pred_check
          %p774 = pneg %p143
        $region62: #{tpu_custom_call.1} parent=59 // pred_check_branch
          %776 = sbr.rel (%p774) target = $region64
        $region63: #{tpu_custom_call.1} parent=59 // pred_region
          %s777 = sand.u32 %s128, 1
          %s778 = scalar_lea.sflag [#allocation4], %s777
          %s779 = sand.u32 %s128, 1
          %s780 = smul.addr %s779, 128
          %s781 = scalar_lea.vmem [#allocation10], %s780
          %783 = dma.done %s778, 2048
        $region64: #{tpu_custom_call.1} parent=59 // pred_fallthru
          _
      $region60: #{tpu_custom_call.1} parent=5 // pred_fallthru
        _
    $region6: #{tpu_custom_call.1} parent=1 // loop_footer
      %s24 = sadd.s32 1, %s20
    $region7: #{tpu_custom_call.1} parent=1 // loop_footer_branch
      %19 = sbr.rel target = $region3
    $region8: #{tpu_custom_call.1} parent=1 // loop_exit
      _
    %784 = vsyncpa [#allocation3], 1
    %s785 = scalar_lea.sflag [#allocation3], 1
    %786 = vsyncpa %s785, 1
    %787 = vsyncpa [#allocation6], 1
    %s788 = scalar_lea.sflag [#allocation6], 1
    %789 = vsyncpa %s788, 1
    %790 = vsyncpa [#allocation9], 1
    %791 = vsyncpa [#allocation4], 1
    %s792 = scalar_lea.sflag [#allocation4], 1
    %793 = vsyncpa %s792, 1

</llo_original>
